<compile_context>
chip_gen: v5e
topology: v5e:2x2
jax: 0.10.0
libtpu: 0.0.40
codegen_flags: <defaults>
</compile_context>

<pallas_src>
import functools

import numpy as np

import jax
import jax.numpy as jnp
from jax.experimental import pallas as pl
from jax.experimental.pallas import tpu as pltpu

LANE = 128
SUBLANE = 8
MAX_BLOCK_ROWS = 1024   # default tile rows; pass max_block_rows=2048 on v7x/v6e.

# ---------------------------------------------------------------------------
# Lanczos approximation (g=7, n=9) of the Gamma function, valid for x > 0.5.  The
# evidential parameterization has alpha > 1, so alpha and alpha - 0.5 are in-domain.
# TODO(synk): no reflection-formula branch for alpha <= 1 (torch.lgamma handles it);
#             documented precondition of the evidential head.
# ---------------------------------------------------------------------------
_LANCZOS_G = 7.0
_LANCZOS_P = (
    0.99999999999980993,
    676.5203681218851,
    -1259.1392167224028,
    771.32342877765313,
    -176.61502916214059,
    12.507343278686905,
    -0.13857109526572012,
    9.9843695780195716e-6,
    1.5056327351493116e-7,
)


def _lanczos_rational_coeffs():
    """Expand A(x) = p0 + sum_k p_k/(x+k-1) into a single rational N(x)/D(x).

    Coefficients are computed once in float64; both polynomials have non-negative
    coefficients, so f32 Horner evaluation at x > 0 is cancellation-free.
    """
    roots = np.arange(0, 8, dtype=np.float64)               # factors (x + r), r=0..7
    den = np.poly1d([1.0])
    for r in roots:
        den = den * np.poly1d([1.0, r])
    num = _LANCZOS_P[0] * den
    for k in range(1, 9):
        partial = np.poly1d([1.0])
        for j, r in enumerate(roots):
            if j != k - 1:
                partial = partial * np.poly1d([1.0, r])
        num = num + _LANCZOS_P[k] * partial
    return (tuple(float(c) for c in num.coeffs),
            tuple(float(c) for c in den.coeffs))


_LANCZOS_NUM, _LANCZOS_DEN = _lanczos_rational_coeffs()
_E_HALF = float(np.exp(0.5))


def _horner(coeffs, x):
    acc = coeffs[0] * x + coeffs[1]
    for c in coeffs[2:]:
        acc = acc * x + c
    return acc


def _evidential_elementwise(mu, v, alpha, beta, target):
    # Gamma(alpha-0.5)/Gamma(alpha) = e^{1/2} (t1/t2)^{alpha-1} t2^{-1/2} A(a-.5)/A(a)
    # A-ratio as one rational -> one EUP divide; four degree-8 Horner evals on VALU.
    x1 = alpha - 0.5
    t1 = alpha + (_LANCZOS_G - 1.0)
    t2 = alpha + (_LANCZOS_G - 0.5)
    num1 = _horner(_LANCZOS_NUM, x1)
    den1 = _horner(_LANCZOS_DEN, x1)
    num2 = _horner(_LANCZOS_NUM, alpha)
    den2 = _horner(_LANCZOS_DEN, alpha)
    a_ratio = (num1 * den2) / (den1 * num2)                   # EUP divide #1
    pow_term = jnp.exp((alpha - 1.0) * jnp.log(t1 / t2))      # divide #2, log, exp
    # Fold t2^{-1/2}, 1/sqrt(beta) and 1/v into one rsqrt (v > 0, beta > 0).
    inv_svvt = jax.lax.rsqrt(t2 * beta * (v * v))             # rsqrt
    coeff = (0.25 * _E_HALF) * pow_term * a_ratio * inv_svvt
    diff2 = (target - mu) ** 2
    second = 2.0 * beta * (1.0 + v) + (2.0 * alpha - 1.0) * v * diff2
    return coeff * second + diff2 * (2.0 * alpha + v)


# ---------------------------------------------------------------------------
# Kernel factory: specialized (at trace time) on mask presence, reduction mode and
# whether the ragged / padded tail needs masking.
# ---------------------------------------------------------------------------
def _make_kernel(has_mask, reduce_mean, need_tail_mask, n_valid, tm, num_ji,
                 num_row_blocks):
    def _compute(in_ref, t_ref, m_ref):
        # Cast-on-load: inputs may be bf16 / int masks; all math is f32 on VPU/EUP.
        mu = in_ref[0, 0].astype(jnp.float32)
        v = in_ref[0, 1].astype(jnp.float32)
        alpha = in_ref[0, 2].astype(jnp.float32)
        beta = in_ref[0, 3].astype(jnp.float32)
        target = t_ref[0].astype(jnp.float32)
        loss = _evidential_elementwise(mu, v, alpha, beta, target)
        if m_ref is not None:
            loss = loss * m_ref[0].astype(jnp.float32)
        return loss

    if reduce_mean:
        def _reduce(loss, out_ref, acc_ref):
            jo = pl.program_id(1)
            ji = pl.program_id(2)

            @pl.when(ji == 0)
            def _():
                acc_ref[...] = jnp.zeros_like(acc_ref)

            if need_tail_mask:
                # Only the final row block can contain padded / OOB elements; keep the
                # iota + compare + where off every other step.
                row_blk = jo * num_ji + ji
                is_tail = row_blk == (num_row_blocks - 1)

                @pl.when(jnp.logical_not(is_tail))
                def _():
                    acc_ref[...] += jnp.sum(loss, axis=0, keepdims=True)

                @pl.when(is_tail)
                def _():
                    row = jax.lax.broadcasted_iota(jnp.int32, (tm, LANE), 0)
                    lane = jax.lax.broadcasted_iota(jnp.int32, (tm, LANE), 1)
                    elem = (row_blk * tm + row) * LANE + lane
                    masked = jnp.where(elem < n_valid, loss, 0.0)
                    acc_ref[...] += jnp.sum(masked, axis=0, keepdims=True)
            else:
                acc_ref[...] += jnp.sum(loss, axis=0, keepdims=True)

            @pl.when(ji == pl.num_programs(2) - 1)
            def _():
                out_ref[0] = acc_ref[...]

        if has_mask:
            def kernel(in_ref, t_ref, m_ref, out_ref, acc_ref):
                _reduce(_compute(in_ref, t_ref, m_ref), out_ref, acc_ref)
        else:
            def kernel(in_ref, t_ref, out_ref, acc_ref):
                _reduce(_compute(in_ref, t_ref, None), out_ref, acc_ref)
    else:
        if has_mask:
            def kernel(in_ref, t_ref, m_ref, out_ref):
                out_ref[0] = _compute(in_ref, t_ref, m_ref).astype(out_ref.dtype)
        else:
            def kernel(in_ref, t_ref, out_ref):
                out_ref[0] = _compute(in_ref, t_ref, None).astype(out_ref.dtype)
    return kernel


def _round_up(x, m):
    return ((x + m - 1) // m) * m


@functools.partial(jax.jit, static_argnames=("reduce_mean", "max_block_rows"))
def evidential_loss(inp, target, mask=None, reduce_mean=True, coeff=1.0,
                    max_block_rows=MAX_BLOCK_ROWS):
    """inp: (B, 4*C, H, W); target: (B, C, H, W); optional mask: (B, C, H, W)."""
    del coeff  # Stored by the torch module but unused in its forward pass.
    b, c4, h, w = inp.shape
    c = c4 // 4
    n = c * h * w                 # elements per evidential param, per batch
    has_mask = mask is not None
    out_dtype = jnp.result_type(inp.dtype, target.dtype)

    # Row-major reshapes are free (bitcasts): chunking dim 1 into 4 == param-major.
    inp3 = inp.reshape(b, 4, n)
    tgt2 = target.reshape(b, n)
    if has_mask:
        # Keep the mask in its native dtype (no full-size wrapper cast); only bool is
        # widened since i1 vectors are not a supported kernel load dtype.
        msk2 = (mask.astype(jnp.float32) if mask.dtype == jnp.bool_ else mask)
        msk2 = msk2.reshape(b, n)
    else:
        msk2 = None

    # Lane padding only when C*H*W is not a multiple of 128.
    n_pad = _round_up(n, LANE)
    if n_pad != n:
        # TODO(synk): the ragged C*H*W path still pays one extra HBM pass for this pad;
        # a copy-free version needs a tail epilogue on the unreshaped layout or manual
        # unaligned DMA — more complexity than this rare case is worth here.
        pad = n_pad - n
        inp3 = jnp.pad(inp3, ((0, 0), (0, 0), (0, pad)), constant_values=2.0)
        tgt2 = jnp.pad(tgt2, ((0, 0), (0, pad)))
        if has_mask:
            msk2 = jnp.pad(msk2, ((0, 0), (0, pad)))

    r = n_pad // LANE
    inp4 = inp3.reshape(b, 4, r, LANE)
    tgt3 = tgt2.reshape(b, r, LANE)
    msk3 = msk2.reshape(b, r, LANE) if has_mask else None

    # tm is either the full row extent (r <= max_block_rows) or a multiple of 8.
    tm = min(r, max_block_rows)
    num_j = -(-r // tm)
    need_tail_mask = (n_pad != n) or (r % tm != 0)

    if reduce_mean:
        # Split the row-block axis so both v7x TensorCores get work when the batch
        # axis alone cannot be balanced (B == 1 or odd B).  Only split evenly.
        num_jo = 2 if (b % 2 == 1 and num_j % 2 == 0) else 1
        num_ji = num_j // num_jo

        in_specs = [
            pl.BlockSpec((1, 4, tm, LANE),
                         lambda bi, jo, ji: (bi, 0, jo * num_ji + ji, 0)),
            pl.BlockSpec((1, tm, LANE),
                         lambda bi, jo, ji: (bi, jo * num_ji + ji, 0)),
        ]
        if has_mask:
            in_specs.append(
                pl.BlockSpec((1, tm, LANE),
                             lambda bi, jo, ji: (bi, jo * num_ji + ji, 0)))
        out_shape = jax.ShapeDtypeStruct((b, num_jo, LANE), jnp.float32)
        out_specs = pl.BlockSpec((1, 1, LANE), lambda bi, jo, ji: (bi, jo, 0))
        scratch_shapes = [pltpu.VMEM((1, LANE), jnp.float32)]
        grid = (b, num_jo, num_ji)
        dims = ("parallel", "parallel", "arbitrary")
    else:
        num_jo, num_ji = 1, num_j
        in_specs = [
            pl.BlockSpec((1, 4, tm, LANE), lambda bi, j: (bi, 0, j, 0)),
            pl.BlockSpec((1, tm, LANE), lambda bi, j: (bi, j, 0)),
        ]
        if has_mask:
            in_specs.append(pl.BlockSpec((1, tm, LANE), lambda bi, j: (bi, j, 0)))
        # Output directly in the result dtype: halves writeback bytes for bf16 and
        # removes the separate XLA cast pass.
        out_shape = jax.ShapeDtypeStruct((b, r, LANE), out_dtype)
        out_specs = pl.BlockSpec((1, tm, LANE), lambda bi, j: (bi, j, 0))
        scratch_shapes = []
        grid = (b, num_j)
        dims = ("parallel", "parallel")

    # Explicit scoped-VMEM budget: 2 pipeline buffers per stream + margin, so raising
    # max_block_rows (e.g. 2048 on v7x) keeps working on every generation.
    bytes_per_step = tm * LANE * (
        4 * jnp.dtype(inp4.dtype).itemsize
        + jnp.dtype(tgt3.dtype).itemsize
        + (jnp.dtype(msk3.dtype).itemsize if has_mask else 0)
        + (0 if reduce_mean else jnp.dtype(out_dtype).itemsize))
    vmem_limit = int(min(max(2 * bytes_per_step + (4 << 20), 16 << 20), 48 << 20))

    kernel = _make_kernel(has_mask, reduce_mean, need_tail_mask, n, tm, num_ji, num_j)
    operands = [inp4, tgt3] + ([msk3] if has_mask else [])

    out = pl.pallas_call(
        kernel,
        out_shape=out_shape,
        grid_spec=pltpu.PrefetchScalarGridSpec(
            num_scalar_prefetch=0,
            grid=grid,
            in_specs=in_specs,
            out_specs=out_specs,
            scratch_shapes=scratch_shapes,
        ),
        compiler_params=pltpu.CompilerParams(
            dimension_semantics=dims, vmem_limit_bytes=vmem_limit),
    )(*operands)

    if reduce_mean:
        return (jnp.sum(out) / (b * n)).astype(out_dtype)
    return out.reshape(b, n_pad)[:, :n].reshape(b, c, h, w)


# ---------------------------------------------------------------------------
# Pure-JAX reference (same math as the torch module, lgamma path via lax.lgamma).
# ---------------------------------------------------------------------------
def _ref_loss(inp, target, mask=None, reduce_mean=True):
    b, c4, h, w = inp.shape
    c = c4 // 4
    mu, v, alpha, beta = (inp[:, i * c:(i + 1) * c] for i in range(4))
    gamma = lambda x: jnp.exp(jax.lax.lgamma(x))
    coeff = gamma(alpha - 0.5) / (4.0 * gamma(alpha) * v * jnp.sqrt(beta))
    second = 2.0 * beta * (1.0 + v) + (2.0 * alpha - 1.0) * v * (target - mu) ** 2
    loss = coeff * second + (target - mu) ** 2 * (2.0 * alpha + v)
    if mask is not None:
        loss = loss * mask
    return jnp.mean(loss) if reduce_mean else loss


def _make_inputs(key, b, c, h, w):
    kmu, kv, ka, kb, kt, km = jax.random.split(key, 6)
    mu = jax.random.normal(kmu, (b, c, h, w), jnp.float32)
    v = jax.nn.softplus(jax.random.normal(kv, (b, c, h, w), jnp.float32)) + 0.1
    alpha = jax.nn.softplus(jax.random.normal(ka, (b, c, h, w), jnp.float32)) + 1.0
    beta = jax.nn.softplus(jax.random.normal(kb, (b, c, h, w), jnp.float32)) + 0.1
    inp = jnp.concatenate([mu, v, alpha, beta], axis=1)          # (B, 4C, H, W)
    target = jax.random.normal(kt, (b, c, h, w), jnp.float32)
    mask = (jax.random.uniform(km, (b, c, h, w)) > 0.3).astype(jnp.float32)
    return inp, target, mask


if __name__ == "__main__":
    key = jax.random.PRNGKey(0)
    k1, k2, k3 = jax.random.split(key, 3)

    # Lane-aligned shape (C*H*W = 1024): exercises all four kernel specializations.
    B, C, H, W = 2, 4, 16, 16
    inp, target, mask = _make_inputs(k1, B, C, H, W)

    out = jax.block_until_ready(evidential_loss(inp, target, mask=mask, reduce_mean=True))
    ref = _ref_loss(inp, target, mask=mask, reduce_mean=True)
    assert jnp.allclose(out, ref, rtol=1e-4, atol=1e-4), (out, ref)

    out = jax.block_until_ready(evidential_loss(inp, target, mask=None, reduce_mean=True))
    ref = _ref_loss(inp, target, mask=None, reduce_mean=True)
    assert jnp.allclose(out, ref, rtol=1e-4, atol=1e-4), (out, ref)

    out = jax.block_until_ready(evidential_loss(inp, target, mask=mask, reduce_mean=False))
    ref = _ref_loss(inp, target, mask=mask, reduce_mean=False)
    assert out.shape == (B, C, H, W)
    assert jnp.allclose(out, ref, rtol=1e-4, atol=1e-4)

    out = jax.block_until_ready(evidential_loss(inp, target, mask=None, reduce_mean=False))
    ref = _ref_loss(inp, target, mask=None, reduce_mean=False)
    assert jnp.allclose(out, ref, rtol=1e-4, atol=1e-4)

    # Non-lane-aligned shape (C*H*W = 105): exercises the padded / tail-masked path.
    B2, C2, H2, W2 = 2, 3, 5, 7
    inp2, target2, mask2 = _make_inputs(k2, B2, C2, H2, W2)

    out = jax.block_until_ready(evidential_loss(inp2, target2, mask=mask2, reduce_mean=True))
    ref = _ref_loss(inp2, target2, mask=mask2, reduce_mean=True)
    assert jnp.allclose(out, ref, rtol=1e-4, atol=1e-4), (out, ref)

    out = jax.block_until_ready(evidential_loss(inp2, target2, mask=None, reduce_mean=False))
    ref = _ref_loss(inp2, target2, mask=None, reduce_mean=False)
    assert out.shape == (B2, C2, H2, W2)
    assert jnp.allclose(out, ref, rtol=1e-4, atol=1e-4)

    # r > MAX_BLOCK_ROWS with r % tm != 0 and B == 1: exercises partial row blocks,
    # the final-block-only tail mask and the j_outer "parallel" split for v7x.
    B3, C3, H3, W3 = 1, 1, 1040, 128
    inp3, target3, _ = _make_inputs(k3, B3, C3, H3, W3)

    out = jax.block_until_ready(evidential_loss(inp3, target3, mask=None, reduce_mean=True))
    ref = _ref_loss(inp3, target3, mask=None, reduce_mean=True)
    assert jnp.allclose(out, ref, rtol=1e-4, atol=1e-4), (out, ref)

    out = jax.block_until_ready(evidential_loss(inp3, target3, mask=None, reduce_mean=False))
    ref = _ref_loss(inp3, target3, mask=None, reduce_mean=False)
    assert out.shape == (B3, C3, H3, W3)
    assert jnp.allclose(out, ref, rtol=1e-4, atol=1e-4)

    print("KERNEL_OK")
</pallas_src>

<mosaic_0001>
module attributes {stable_mosaic.version = 11 : i64} {
  func.func @kernel(%arg0: i32, %arg1: i32, %arg2: i32, %arg3: memref<1x4x8x128xf32, #tpu.memory_space<vmem>>, %arg4: memref<1x8x128xf32, #tpu.memory_space<vmem>>, %arg5: memref<1x8x128xf32, #tpu.memory_space<vmem>>, %arg6: memref<1x1x128xf32, #tpu.memory_space<vmem>>, %arg7: memref<1x128xf32, #tpu.memory_space<vmem>>) attributes {dimension_semantics = [#tpu.dimension_semantics<parallel>, #tpu.dimension_semantics<parallel>, #tpu.dimension_semantics<arbitrary>], iteration_bounds = array<i64: 2, 1, 1>, scalar_prefetch = 0 : i64, scratch_operands = 1 : i64, tpu.core_type = #tpu.core_type<tc>, window_params = [{transform_indices = @transform_0, window_bounds = array<i64: 1, 4, 8, 128>}, {transform_indices = @transform_1, window_bounds = array<i64: 1, 8, 128>}, {transform_indices = @transform_2, window_bounds = array<i64: 1, 8, 128>}, {transform_indices = @transform_3, window_bounds = array<i64: 1, 1, 128>}]} {
    %c0 = arith.constant 0 : index
    %c0_0 = arith.constant 0 : index
    %c0_1 = arith.constant 0 : index
    %c0_2 = arith.constant 0 : index
    %0 = vector.load %arg3[%c0, %c0_0, %c0_1, %c0_2] : memref<1x4x8x128xf32, #tpu.memory_space<vmem>>, vector<1x1x8x128xf32>
    %1 = vector.shape_cast %0 : vector<1x1x8x128xf32> to vector<8x128xf32>
    %c0_3 = arith.constant 0 : index
    %c1 = arith.constant 1 : index
    %c0_4 = arith.constant 0 : index
    %c0_5 = arith.constant 0 : index
    %2 = vector.load %arg3[%c0_3, %c1, %c0_4, %c0_5] : memref<1x4x8x128xf32, #tpu.memory_space<vmem>>, vector<1x1x8x128xf32>
    %3 = vector.shape_cast %2 : vector<1x1x8x128xf32> to vector<8x128xf32>
    %c0_6 = arith.constant 0 : index
    %c2 = arith.constant 2 : index
    %c0_7 = arith.constant 0 : index
    %c0_8 = arith.constant 0 : index
    %4 = vector.load %arg3[%c0_6, %c2, %c0_7, %c0_8] : memref<1x4x8x128xf32, #tpu.memory_space<vmem>>, vector<1x1x8x128xf32>
    %5 = vector.shape_cast %4 : vector<1x1x8x128xf32> to vector<8x128xf32>
    %c0_9 = arith.constant 0 : index
    %c3 = arith.constant 3 : index
    %c0_10 = arith.constant 0 : index
    %c0_11 = arith.constant 0 : index
    %6 = vector.load %arg3[%c0_9, %c3, %c0_10, %c0_11] : memref<1x4x8x128xf32, #tpu.memory_space<vmem>>, vector<1x1x8x128xf32>
    %7 = vector.shape_cast %6 : vector<1x1x8x128xf32> to vector<8x128xf32>
    %c0_12 = arith.constant 0 : index
    %c0_13 = arith.constant 0 : index
    %c0_14 = arith.constant 0 : index
    %8 = vector.load %arg4[%c0_12, %c0_13, %c0_14] : memref<1x8x128xf32, #tpu.memory_space<vmem>>, vector<1x8x128xf32>
    %9 = vector.shape_cast %8 : vector<1x8x128xf32> to vector<8x128xf32>
    %cst = arith.constant 5.000000e-01 : f32
    %10 = vector.broadcast %cst : f32 to vector<8x128xf32>
    %11 = arith.subf %5, %10 : vector<8x128xf32>
    %cst_15 = arith.constant 6.000000e+00 : f32
    %12 = vector.broadcast %cst_15 : f32 to vector<8x128xf32>
    %13 = arith.addf %5, %12 : vector<8x128xf32>
    %cst_16 = arith.constant 6.500000e+00 : f32
    %14 = vector.broadcast %cst_16 : f32 to vector<8x128xf32>
    %15 = arith.addf %5, %14 : vector<8x128xf32>
    %cst_17 = arith.constant 1.000000e+00 : f32
    %16 = vector.broadcast %cst_17 : f32 to vector<8x128xf32>
    %17 = arith.mulf %16, %11 : vector<8x128xf32>
    %cst_18 = arith.constant 52.4583321 : f32
    %18 = vector.broadcast %cst_18 : f32 to vector<8x128xf32>
    %19 = arith.addf %17, %18 : vector<8x128xf32>
    %20 = arith.mulf %19, %11 : vector<8x128xf32>
    %cst_19 = arith.constant 1203.83423 : f32
    %21 = vector.broadcast %cst_19 : f32 to vector<8x128xf32>
    %22 = arith.addf %20, %21 : vector<8x128xf32>
    %23 = arith.mulf %22, %11 : vector<8x128xf32>
    %cst_20 = arith.constant 15784.8809 : f32
    %24 = vector.broadcast %cst_20 : f32 to vector<8x128xf32>
    %25 = arith.addf %23, %24 : vector<8x128xf32>
    %26 = arith.mulf %25, %11 : vector<8x128xf32>
    %cst_21 = arith.constant 129347.258 : f32
    %27 = vector.broadcast %cst_21 : f32 to vector<8x128xf32>
    %28 = arith.addf %26, %27 : vector<8x128xf32>
    %29 = arith.mulf %28, %11 : vector<8x128xf32>
    %cst_22 = arith.constant 678289.688 : f32
    %30 = vector.broadcast %cst_22 : f32 to vector<8x128xf32>
    %31 = arith.addf %29, %30 : vector<8x128xf32>
    %32 = arith.mulf %31, %11 : vector<8x128xf32>
    %cst_23 = arith.constant 2222880.5 : f32
    %33 = vector.broadcast %cst_23 : f32 to vector<8x128xf32>
    %34 = arith.addf %32, %33 : vector<8x128xf32>
    %35 = arith.mulf %34, %11 : vector<8x128xf32>
    %cst_24 = arith.constant 0x4A7E0D50 : f32
    %36 = vector.broadcast %cst_24 : f32 to vector<8x128xf32>
    %37 = arith.addf %35, %36 : vector<8x128xf32>
    %38 = arith.mulf %37, %11 : vector<8x128xf32>
    %cst_25 = arith.constant 3409662.75 : f32
    %39 = vector.broadcast %cst_25 : f32 to vector<8x128xf32>
    %40 = arith.addf %38, %39 : vector<8x128xf32>
    %cst_26 = arith.constant 1.000000e+00 : f32
    %41 = vector.broadcast %cst_26 : f32 to vector<8x128xf32>
    %42 = arith.mulf %41, %11 : vector<8x128xf32>
    %cst_27 = arith.constant 2.800000e+01 : f32
    %43 = vector.broadcast %cst_27 : f32 to vector<8x128xf32>
    %44 = arith.addf %42, %43 : vector<8x128xf32>
    %45 = arith.mulf %44, %11 : vector<8x128xf32>
    %cst_28 = arith.constant 3.220000e+02 : f32
    %46 = vector.broadcast %cst_28 : f32 to vector<8x128xf32>
    %47 = arith.addf %45, %46 : vector<8x128xf32>
    %48 = arith.mulf %47, %11 : vector<8x128xf32>
    %cst_29 = arith.constant 1.960000e+03 : f32
    %49 = vector.broadcast %cst_29 : f32 to vector<8x128xf32>
    %50 = arith.addf %48, %49 : vector<8x128xf32>
    %51 = arith.mulf %50, %11 : vector<8x128xf32>
    %cst_30 = arith.constant 6.769000e+03 : f32
    %52 = vector.broadcast %cst_30 : f32 to vector<8x128xf32>
    %53 = arith.addf %51, %52 : vector<8x128xf32>
    %54 = arith.mulf %53, %11 : vector<8x128xf32>
    %cst_31 = arith.constant 1.313200e+04 : f32
    %55 = vector.broadcast %cst_31 : f32 to vector<8x128xf32>
    %56 = arith.addf %54, %55 : vector<8x128xf32>
    %57 = arith.mulf %56, %11 : vector<8x128xf32>
    %cst_32 = arith.constant 1.306800e+04 : f32
    %58 = vector.broadcast %cst_32 : f32 to vector<8x128xf32>
    %59 = arith.addf %57, %58 : vector<8x128xf32>
    %60 = arith.mulf %59, %11 : vector<8x128xf32>
    %cst_33 = arith.constant 5.040000e+03 : f32
    %61 = vector.broadcast %cst_33 : f32 to vector<8x128xf32>
    %62 = arith.addf %60, %61 : vector<8x128xf32>
    %63 = arith.mulf %62, %11 : vector<8x128xf32>
    %cst_34 = arith.constant 0.000000e+00 : f32
    %64 = vector.broadcast %cst_34 : f32 to vector<8x128xf32>
    %65 = arith.addf %63, %64 : vector<8x128xf32>
    %cst_35 = arith.constant 1.000000e+00 : f32
    %66 = vector.broadcast %cst_35 : f32 to vector<8x128xf32>
    %67 = arith.mulf %66, %5 : vector<8x128xf32>
    %cst_36 = arith.constant 52.4583321 : f32
    %68 = vector.broadcast %cst_36 : f32 to vector<8x128xf32>
    %69 = arith.addf %67, %68 : vector<8x128xf32>
    %70 = arith.mulf %69, %5 : vector<8x128xf32>
    %cst_37 = arith.constant 1203.83423 : f32
    %71 = vector.broadcast %cst_37 : f32 to vector<8x128xf32>
    %72 = arith.addf %70, %71 : vector<8x128xf32>
    %73 = arith.mulf %72, %5 : vector<8x128xf32>
    %cst_38 = arith.constant 15784.8809 : f32
    %74 = vector.broadcast %cst_38 : f32 to vector<8x128xf32>
    %75 = arith.addf %73, %74 : vector<8x128xf32>
    %76 = arith.mulf %75, %5 : vector<8x128xf32>
    %cst_39 = arith.constant 129347.258 : f32
    %77 = vector.broadcast %cst_39 : f32 to vector<8x128xf32>
    %78 = arith.addf %76, %77 : vector<8x128xf32>
    %79 = arith.mulf %78, %5 : vector<8x128xf32>
    %cst_40 = arith.constant 678289.688 : f32
    %80 = vector.broadcast %cst_40 : f32 to vector<8x128xf32>
    %81 = arith.addf %79, %80 : vector<8x128xf32>
    %82 = arith.mulf %81, %5 : vector<8x128xf32>
    %cst_41 = arith.constant 2222880.5 : f32
    %83 = vector.broadcast %cst_41 : f32 to vector<8x128xf32>
    %84 = arith.addf %82, %83 : vector<8x128xf32>
    %85 = arith.mulf %84, %5 : vector<8x128xf32>
    %cst_42 = arith.constant 0x4A7E0D50 : f32
    %86 = vector.broadcast %cst_42 : f32 to vector<8x128xf32>
    %87 = arith.addf %85, %86 : vector<8x128xf32>
    %88 = arith.mulf %87, %5 : vector<8x128xf32>
    %cst_43 = arith.constant 3409662.75 : f32
    %89 = vector.broadcast %cst_43 : f32 to vector<8x128xf32>
    %90 = arith.addf %88, %89 : vector<8x128xf32>
    %cst_44 = arith.constant 1.000000e+00 : f32
    %91 = vector.broadcast %cst_44 : f32 to vector<8x128xf32>
    %92 = arith.mulf %91, %5 : vector<8x128xf32>
    %cst_45 = arith.constant 2.800000e+01 : f32
    %93 = vector.broadcast %cst_45 : f32 to vector<8x128xf32>
    %94 = arith.addf %92, %93 : vector<8x128xf32>
    %95 = arith.mulf %94, %5 : vector<8x128xf32>
    %cst_46 = arith.constant 3.220000e+02 : f32
    %96 = vector.broadcast %cst_46 : f32 to vector<8x128xf32>
    %97 = arith.addf %95, %96 : vector<8x128xf32>
    %98 = arith.mulf %97, %5 : vector<8x128xf32>
    %cst_47 = arith.constant 1.960000e+03 : f32
    %99 = vector.broadcast %cst_47 : f32 to vector<8x128xf32>
    %100 = arith.addf %98, %99 : vector<8x128xf32>
    %101 = arith.mulf %100, %5 : vector<8x128xf32>
    %cst_48 = arith.constant 6.769000e+03 : f32
    %102 = vector.broadcast %cst_48 : f32 to vector<8x128xf32>
    %103 = arith.addf %101, %102 : vector<8x128xf32>
    %104 = arith.mulf %103, %5 : vector<8x128xf32>
    %cst_49 = arith.constant 1.313200e+04 : f32
    %105 = vector.broadcast %cst_49 : f32 to vector<8x128xf32>
    %106 = arith.addf %104, %105 : vector<8x128xf32>
    %107 = arith.mulf %106, %5 : vector<8x128xf32>
    %cst_50 = arith.constant 1.306800e+04 : f32
    %108 = vector.broadcast %cst_50 : f32 to vector<8x128xf32>
    %109 = arith.addf %107, %108 : vector<8x128xf32>
    %110 = arith.mulf %109, %5 : vector<8x128xf32>
    %cst_51 = arith.constant 5.040000e+03 : f32
    %111 = vector.broadcast %cst_51 : f32 to vector<8x128xf32>
    %112 = arith.addf %110, %111 : vector<8x128xf32>
    %113 = arith.mulf %112, %5 : vector<8x128xf32>
    %cst_52 = arith.constant 0.000000e+00 : f32
    %114 = vector.broadcast %cst_52 : f32 to vector<8x128xf32>
    %115 = arith.addf %113, %114 : vector<8x128xf32>
    %116 = arith.mulf %40, %115 : vector<8x128xf32>
    %117 = arith.mulf %65, %90 : vector<8x128xf32>
    %118 = arith.divf %116, %117 : vector<8x128xf32>
    %cst_53 = arith.constant 1.000000e+00 : f32
    %119 = vector.broadcast %cst_53 : f32 to vector<8x128xf32>
    %120 = arith.subf %5, %119 : vector<8x128xf32>
    %121 = arith.divf %13, %15 : vector<8x128xf32>
    %122 = math.log %121 : vector<8x128xf32>
    %123 = arith.mulf %120, %122 : vector<8x128xf32>
    %124 = math.exp %123 : vector<8x128xf32>
    %125 = arith.mulf %15, %7 : vector<8x128xf32>
    %126 = arith.mulf %3, %3 : vector<8x128xf32>
    %127 = arith.mulf %125, %126 : vector<8x128xf32>
    %128 = math.rsqrt %127 : vector<8x128xf32>
    %cst_54 = arith.constant 0.412180305 : f32
    %129 = vector.broadcast %cst_54 : f32 to vector<8x128xf32>
    %130 = arith.mulf %129, %124 : vector<8x128xf32>
    %131 = arith.mulf %130, %118 : vector<8x128xf32>
    %132 = arith.mulf %131, %128 : vector<8x128xf32>
    %133 = arith.subf %9, %1 : vector<8x128xf32>
    %134 = arith.mulf %133, %133 : vector<8x128xf32>
    %cst_55 = arith.constant 2.000000e+00 : f32
    %135 = vector.broadcast %cst_55 : f32 to vector<8x128xf32>
    %136 = arith.mulf %135, %7 : vector<8x128xf32>
    %cst_56 = arith.constant 1.000000e+00 : f32
    %137 = vector.broadcast %cst_56 : f32 to vector<8x128xf32>
    %138 = arith.addf %137, %3 : vector<8x128xf32>
    %139 = arith.mulf %136, %138 : vector<8x128xf32>
    %cst_57 = arith.constant 2.000000e+00 : f32
    %140 = vector.broadcast %cst_57 : f32 to vector<8x128xf32>
    %141 = arith.mulf %140, %5 : vector<8x128xf32>
    %cst_58 = arith.constant 1.000000e+00 : f32
    %142 = vector.broadcast %cst_58 : f32 to vector<8x128xf32>
    %143 = arith.subf %141, %142 : vector<8x128xf32>
    %144 = arith.mulf %143, %3 : vector<8x128xf32>
    %145 = arith.mulf %144, %134 : vector<8x128xf32>
    %146 = arith.addf %139, %145 : vector<8x128xf32>
    %147 = arith.mulf %132, %146 : vector<8x128xf32>
    %cst_59 = arith.constant 2.000000e+00 : f32
    %148 = vector.broadcast %cst_59 : f32 to vector<8x128xf32>
    %149 = arith.mulf %148, %5 : vector<8x128xf32>
    %150 = arith.addf %149, %3 : vector<8x128xf32>
    %151 = arith.mulf %134, %150 : vector<8x128xf32>
    %152 = arith.addf %147, %151 : vector<8x128xf32>
    %c0_60 = arith.constant 0 : index
    %c0_61 = arith.constant 0 : index
    %c0_62 = arith.constant 0 : index
    %153 = vector.load %arg5[%c0_60, %c0_61, %c0_62] : memref<1x8x128xf32, #tpu.memory_space<vmem>>, vector<1x8x128xf32>
    %154 = vector.shape_cast %153 : vector<1x8x128xf32> to vector<8x128xf32>
    %155 = arith.mulf %152, %154 : vector<8x128xf32>
    %c0_i32 = arith.constant 0 : i32
    %156 = arith.cmpi eq, %arg2, %c0_i32 : i32
    %157 = arith.extui %156 : i1 to i32
    %c0_i32_63 = arith.constant 0 : i32
    %158 = arith.cmpi ne, %157, %c0_i32_63 : i32
    scf.if %158 {
      %cst_71 = arith.constant 0.000000e+00 : f32
      %167 = vector.broadcast %cst_71 : f32 to vector<1x128xf32>
      %c0_72 = arith.constant 0 : index
      %c0_73 = arith.constant 0 : index
      %168 = vector.load %arg7[%c0_72, %c0_73] : memref<1x128xf32, #tpu.memory_space<vmem>>, vector<1x128xf32>
      tpu.vector_store %arg7[%c0_72, %c0_73], %167 {strides = array<i32>} : memref<1x128xf32, #tpu.memory_space<vmem>>, vector<1x128xf32>,
    } else {
    }
    %c0_64 = arith.constant 0 : index
    %c0_65 = arith.constant 0 : index
    %159 = vector.load %arg7[%c0_64, %c0_65] : memref<1x128xf32, #tpu.memory_space<vmem>>, vector<1x128xf32>
    %cst_66 = arith.constant dense<0.000000e+00> : vector<128xf32>
    %160 = vector.multi_reduction <add>, %155, %cst_66 [0] : vector<8x128xf32> to vector<128xf32>
    %161 = vector.shape_cast %160 : vector<128xf32> to vector<1x128xf32>
    %162 = arith.addf %159, %161 : vector<1x128xf32>
    %c0_67 = arith.constant 0 : index
    %c0_68 = arith.constant 0 : index
    %163 = vector.load %arg7[%c0_67, %c0_68] : memref<1x128xf32, #tpu.memory_space<vmem>>, vector<1x128xf32>
    tpu.vector_store %arg7[%c0_67, %c0_68], %162 {strides = array<i32>} : memref<1x128xf32, #tpu.memory_space<vmem>>, vector<1x128xf32>,
    %c0_i32_69 = arith.constant 0 : i32
    %164 = arith.cmpi eq, %arg2, %c0_i32_69 : i32
    %165 = arith.extui %164 : i1 to i32
    %c0_i32_70 = arith.constant 0 : i32
    %166 = arith.cmpi ne, %165, %c0_i32_70 : i32
    scf.if %166 {
      %c0_71 = arith.constant 0 : index
      %c0_72 = arith.constant 0 : index
      %167 = vector.load %arg7[%c0_71, %c0_72] : memref<1x128xf32, #tpu.memory_space<vmem>>, vector<1x128xf32>
      %c0_73 = arith.constant 0 : index
      %c0_74 = arith.constant 0 : index
      %c0_75 = arith.constant 0 : index
      %168 = vector.load %arg6[%c0_73, %c0_74, %c0_75] : memref<1x1x128xf32, #tpu.memory_space<vmem>>, vector<1x1x128xf32>
      %169 = vector.shape_cast %168 : vector<1x1x128xf32> to vector<1x128xf32>
      %170 = vector.shape_cast %167 : vector<1x128xf32> to vector<1x1x128xf32>
      tpu.vector_store %arg6[%c0_73, %c0_74, %c0_75], %170 {strides = array<i32>} : memref<1x1x128xf32, #tpu.memory_space<vmem>>, vector<1x1x128xf32>,
    } else {
    }
    return
  }
  func.func @transform_0(%arg0: i32, %arg1: i32, %arg2: i32) -> (i32, i32, i32, i32) {
    %c1_i32 = arith.constant 1 : i32
    %0 = arith.muli %arg1, %c1_i32 : i32
    %1 = arith.addi %0, %arg2 : i32
    %c0_i32 = arith.constant 0 : i32
    %c0_i32_0 = arith.constant 0 : i32
    %c0_i32_1 = arith.constant 0 : i32
    return %arg0, %c0_i32, %1, %c0_i32_0 : i32, i32, i32, i32
  }
  func.func @transform_1(%arg0: i32, %arg1: i32, %arg2: i32) -> (i32, i32, i32) {
    %c1_i32 = arith.constant 1 : i32
    %0 = arith.muli %arg1, %c1_i32 : i32
    %1 = arith.addi %0, %arg2 : i32
    %c0_i32 = arith.constant 0 : i32
    %c0_i32_0 = arith.constant 0 : i32
    return %arg0, %1, %c0_i32 : i32, i32, i32
  }
  func.func @transform_2(%arg0: i32, %arg1: i32, %arg2: i32) -> (i32, i32, i32) {
    %c1_i32 = arith.constant 1 : i32
    %0 = arith.muli %arg1, %c1_i32 : i32
    %1 = arith.addi %0, %arg2 : i32
    %c0_i32 = arith.constant 0 : i32
    %c0_i32_0 = arith.constant 0 : i32
    return %arg0, %1, %c0_i32 : i32, i32, i32
  }
  func.func @transform_3(%arg0: i32, %arg1: i32, %arg2: i32) -> (i32, i32, i32) {
    %c0_i32 = arith.constant 0 : i32
    %c0_i32_0 = arith.constant 0 : i32
    return %arg0, %arg1, %c0_i32 : i32, i32, i32
  }
}

</mosaic_0001>

<llo_original>
// kernel: evidential_loss.1
$region0: #{evidential_loss.1}
  #allocation0 [shape = 'u32[]', space=smem, size = 0x4, offset = 0x4, fixed_abs, tag = 'smem constant byte address 0x4 - core index']
  #allocation1 [shape = 'u32[72,128]{1,0:T(1,128)}', space=vmem, size = 0x9000, scoped, tag = 'internal scratch']
  #allocation2 [shape = 'f32[1,128]{1,0:T(1,128)}', space=vmem, size = 0x200, scoped, tag = 'scratch operand']
  %s0 = inlined_call_operand.vmem [shape: f32[2,4,8,128], index: 0, kind: input, shape index: {}]
  %s1 = inlined_call_operand.vmem [shape: f32[2,8,128], index: 1, kind: input, shape index: {}]
  %s2 = inlined_call_operand.vmem [shape: f32[2,8,128], index: 2, kind: input, shape index: {}]
  %s3 = inlined_call_operand.vmem [shape: f32[2,1,128], index: 3, kind: output, shape index: {}]
  %s4 = sld [smem:[#allocation0]]
  $region53: #{evidential_loss.1} parent=0
    _
  %s6 = ssub.s32 1, %s4
  %s7 = scalar_select 0, %s6, %s4
  loop: start=0, step=1, limit=4
  $region2: #{evidential_loss.1} parent=0 // loop_pre_header
    _
  $region3: #{evidential_loss.1} parent=0 // loop_header
    %s9 = sphi 0, %s13
    %p10 = scmp.ge.s32.totalorder %s9, 4
    %s16 = sphi 0, %s35
    %s17 = sphi 0, %s31
    %s18 = sphi 0, %s27
    %s19 = sphi 0, %s16
    %s20 = sphi 0, %s17
    %s21 = sphi 0, %s18
    %s22 = sphi 0, %s19
    %s23 = sphi 0, %s20
    %s24 = sphi 0, %s21
    %s42 = sphi 0, %s44
    %s45 = sphi 0, %s42
    %s46 = sphi 0, %s45
    %s62 = sphi 0, %s46
    %s72 = sphi 0, %s74
    %s75 = sphi 0, %s72
    %s76 = sphi 0, %s75
    %s92 = sphi 0, %s76
    %s102 = sphi 0, %s104
    %s105 = sphi 0, %s102
    %s106 = sphi 0, %s105
    %s122 = sphi 0, %s106
    %s130 = sphi 0, %s132
    %s133 = sphi 0, %s130
    %s134 = sphi 0, %s133
    %s150 = sphi 0, %s134
  $region4: #{evidential_loss.1} parent=0 // loop_header_branch
    %12 = sbr.rel (%p10) target = $region8
  $region5: #{evidential_loss.1} parent=0 // loop_body
    %s14 = ssub.s32 %s9, 1
    %s15 = ssub.s32 %s9, 2
    %s25 = sadd.s32 1, %s18
    %p26 = scmp.ge.s32.totalorder %s25, 1
    %s27 = scalar_select %p26, 0, %s25
    %s28 = sadd.s32 1, %s17
    %s29 = scalar_select %p26, %s28, %s17
    %p30 = scmp.ge.s32.totalorder %s29, 1
    %s31 = scalar_select %p30, 0, %s29
    %s32 = sadd.s32 1, %s16
    %s33 = scalar_select %p30, %s32, %s16
    %p34 = scmp.ge.s32.totalorder %s33, 2
    %s35 = scalar_select %p34, 0, %s33
    %s36 = sadd.s32 %s17, %s18
    %s37 = sadd.s32 %s31, %s27
    %s38 = ssub.s32 %s16, %s35
    %s39 = ssub.s32 %s36, %s37
    %s40 = sor.u32 %s38, %s39
    %p41 = scmp.eq.s32.totalorder %s40, 0
    %s43 = sadd.s32 %s42, 1
    %s44 = scalar_select %p41, %s42, %s43
    %p47 = pneg %p41
    %p48 = scmp.eq.s32.totalorder %s9, 1
    %p49 = por %p47, %p48
    %p50 = scmp.ne.s32.totalorder %s42, %s45
    %p51 = scmp.eq.s32.totalorder %s9, 0
    %p52 = por %p50, %p51
    %p53 = scmp.ne.s32.totalorder %s42, %s45
    %p54 = scmp.eq.s32.totalorder %s14, 1
    %p55 = por %p53, %p54
    %p56 = scmp.ne.s32.totalorder %s45, %s46
    %p57 = scmp.eq.s32.totalorder %s14, 0
    %p58 = por %p56, %p57
    %p59 = scmp.ne.s32.totalorder %s45, %s46
    %p60 = scmp.eq.s32.totalorder %s15, 1
    %p61 = por %p59, %p60
    %p63 = scmp.ne.s32.totalorder %s46, %s62
    %p64 = scmp.eq.s32.totalorder %s15, 0
    %p65 = por %p63, %p64
    %s66 = sadd.s32 %s17, %s18
    %s67 = sadd.s32 %s31, %s27
    %s68 = ssub.s32 %s16, %s35
    %s69 = ssub.s32 %s66, %s67
    %s70 = sor.u32 %s68, %s69
    %p71 = scmp.eq.s32.totalorder %s70, 0
    %s73 = sadd.s32 %s72, 1
    %s74 = scalar_select %p71, %s72, %s73
    %p77 = pneg %p71
    %p78 = scmp.eq.s32.totalorder %s9, 1
    %p79 = por %p77, %p78
    %p80 = scmp.ne.s32.totalorder %s72, %s75
    %p81 = scmp.eq.s32.totalorder %s9, 0
    %p82 = por %p80, %p81
    %p83 = scmp.ne.s32.totalorder %s72, %s75
    %p84 = scmp.eq.s32.totalorder %s14, 1
    %p85 = por %p83, %p84
    %p86 = scmp.ne.s32.totalorder %s75, %s76
    %p87 = scmp.eq.s32.totalorder %s14, 0
    %p88 = por %p86, %p87
    %p89 = scmp.ne.s32.totalorder %s75, %s76
    %p90 = scmp.eq.s32.totalorder %s15, 1
    %p91 = por %p89, %p90
    %p93 = scmp.ne.s32.totalorder %s76, %s92
    %p94 = scmp.eq.s32.totalorder %s15, 0
    %p95 = por %p93, %p94
    %s96 = sadd.s32 %s17, %s18
    %s97 = sadd.s32 %s31, %s27
    %s98 = ssub.s32 %s16, %s35
    %s99 = ssub.s32 %s96, %s97
    %s100 = sor.u32 %s98, %s99
    %p101 = scmp.eq.s32.totalorder %s100, 0
    %s103 = sadd.s32 %s102, 1
    %s104 = scalar_select %p101, %s102, %s103
    %p107 = pneg %p101
    %p108 = scmp.eq.s32.totalorder %s9, 1
    %p109 = por %p107, %p108
    %p110 = scmp.ne.s32.totalorder %s102, %s105
    %p111 = scmp.eq.s32.totalorder %s9, 0
    %p112 = por %p110, %p111
    %p113 = scmp.ne.s32.totalorder %s102, %s105
    %p114 = scmp.eq.s32.totalorder %s14, 1
    %p115 = por %p113, %p114
    %p116 = scmp.ne.s32.totalorder %s105, %s106
    %p117 = scmp.eq.s32.totalorder %s14, 0
    %p118 = por %p116, %p117
    %p119 = scmp.ne.s32.totalorder %s105, %s106
    %p120 = scmp.eq.s32.totalorder %s15, 1
    %p121 = por %p119, %p120
    %p123 = scmp.ne.s32.totalorder %s106, %s122
    %p124 = scmp.eq.s32.totalorder %s15, 0
    %p125 = por %p123, %p124
    %s126 = ssub.s32 %s16, %s35
    %s127 = ssub.s32 %s17, %s31
    %s128 = sor.u32 %s126, %s127
    %p129 = scmp.eq.s32.totalorder %s128, 0
    %s131 = sadd.s32 %s130, 1
    %s132 = scalar_select %p129, %s130, %s131
    %p135 = pneg %p129
    %p136 = scmp.eq.s32.totalorder %s9, 1
    %p137 = por %p135, %p136
    %p138 = scmp.ne.s32.totalorder %s130, %s133
    %p139 = scmp.eq.s32.totalorder %s9, 0
    %p140 = por %p138, %p139
    %p141 = scmp.ne.s32.totalorder %s130, %s133
    %p142 = scmp.eq.s32.totalorder %s14, 1
    %p143 = por %p141, %p142
    %p144 = scmp.ne.s32.totalorder %s133, %s134
    %p145 = scmp.eq.s32.totalorder %s14, 0
    %p146 = por %p144, %p145
    %p147 = scmp.ne.s32.totalorder %s133, %s134
    %p148 = scmp.eq.s32.totalorder %s15, 1
    %p149 = por %p147, %p148
    %p151 = scmp.ne.s32.totalorder %s134, %s150
    %p152 = scmp.eq.s32.totalorder %s15, 0
    %p153 = por %p151, %p152
    %p154 = scmp.le.s32.totalorder 1, %s9
    %p155 = scmp.lt.s32.totalorder %s9, 3
    %p156 = pnand %p154, %p155
    %p157 = pneg %p156
    // Predicated region
    $region9: #{evidential_loss.1} parent=5 // pred_check
      _
    $region10: #{evidential_loss.1} parent=5 // pred_check_branch
      %159 = sbr.rel (%p156) target = $region12
    $region11: #{evidential_loss.1} parent=5 // pred_region
      %s160 = ssub.s32 %s9, 1
    $region12: #{evidential_loss.1} parent=5 // pred_fallthru
      _
    %p161 = scmp.lt.s32.totalorder %s9, 2
    // Predicated region
    $region13: #{evidential_loss.1} parent=5 // pred_check
      %p162 = pneg %p161
    $region14: #{evidential_loss.1} parent=5 // pred_check_branch
      %164 = sbr.rel (%p162) target = $region16
    $region15: #{evidential_loss.1} parent=5 // pred_region
      // Predicated region
      $region17: #{evidential_loss.1} parent=15 // pred_check
        %p165 = pneg %p52
      $region18: #{evidential_loss.1} parent=15 // pred_check_branch
        %167 = sbr.rel (%p165) target = $region20
      $region19: #{evidential_loss.1} parent=15 // pred_region
        %s168 = sadd.s32 %s17, %s18
        %p169 = scmp.lt.s32.totalorder %s16, 1
        %s170 = scalar_select %p169, %s16, 1
        %p171 = scmp.lt.s32.totalorder %s168, 0
        %s172 = scalar_select %p171, %s168, 0
        %s173 = smul.addr %s170, 4
        %s174 = sadd.s32 %s172, %s173
        %s175 = smul.addr %s174, 8
        %s176 = scalar_lea.vmem %s0, %s175
        %s177 = sadd.s32 %s17, %s18
      $region20: #{evidential_loss.1} parent=15 // pred_fallthru
        _
      // Predicated region
      $region21: #{evidential_loss.1} parent=15 // pred_check
        %p178 = pneg %p82
      $region22: #{evidential_loss.1} parent=15 // pred_check_branch
        %180 = sbr.rel (%p178) target = $region24
      $region23: #{evidential_loss.1} parent=15 // pred_region
        %s181 = sadd.s32 %s17, %s18
        %p182 = scmp.lt.s32.totalorder %s16, 1
        %s183 = scalar_select %p182, %s16, 1
        %p184 = scmp.lt.s32.totalorder %s181, 0
        %s185 = scalar_select %p184, %s181, 0
        %s186 = sadd.s32 %s185, %s183
        %s187 = smul.addr %s186, 8
        %s188 = scalar_lea.vmem %s1, %s187
        %s189 = sadd.s32 %s17, %s18
      $region24: #{evidential_loss.1} parent=15 // pred_fallthru
        _
      // Predicated region
      $region25: #{evidential_loss.1} parent=15 // pred_check
        %p190 = pneg %p112
      $region26: #{evidential_loss.1} parent=15 // pred_check_branch
        %192 = sbr.rel (%p190) target = $region28
      $region27: #{evidential_loss.1} parent=15 // pred_region
        %s193 = sadd.s32 %s17, %s18
        %p194 = scmp.lt.s32.totalorder %s16, 1
        %s195 = scalar_select %p194, %s16, 1
        %p196 = scmp.lt.s32.totalorder %s193, 0
        %s197 = scalar_select %p196, %s193, 0
        %s198 = sadd.s32 %s197, %s195
        %s199 = smul.addr %s198, 8
        %s200 = scalar_lea.vmem %s2, %s199
        %s201 = sadd.s32 %s17, %s18
      $region28: #{evidential_loss.1} parent=15 // pred_fallthru
        _
    $region16: #{evidential_loss.1} parent=5 // pred_fallthru
      _
    %p202 = scmp.le.s32.totalorder 1, %s9
    %p203 = scmp.lt.s32.totalorder %s9, 3
    %p204 = pnand %p202, %p203
    %p205 = pneg %p204
    // Predicated region
    $region29: #{evidential_loss.1} parent=5 // pred_check
      _
    $region30: #{evidential_loss.1} parent=5 // pred_check_branch
      %207 = sbr.rel (%p204) target = $region32
    $region31: #{evidential_loss.1} parent=5 // pred_region
      %s208 = ssub.s32 %s9, 1
      %s209 = sadd.s32 %s20, %s21
      %p210 = scmp.lt.s32.totalorder %s19, 1
      %s211 = scalar_select %p210, %s19, 1
      %p212 = scmp.lt.s32.totalorder %s209, 0
      %s213 = scalar_select %p212, %s209, 0
      %s214 = smul.addr %s211, 4
      %s215 = sadd.s32 %s213, %s214
      %s216 = smul.addr %s215, 8
      %s217 = scalar_lea.vmem %s0, %s216
      %p218 = pneg %p58
      %p219 = pneg %p55
      %s220 = sadd.s32 %s20, %s21
      %p221 = scmp.lt.s32.totalorder %s19, 1
      %s222 = scalar_select %p221, %s19, 1
      %p223 = scmp.lt.s32.totalorder %s220, 0
      %s224 = scalar_select %p223, %s220, 0
      %s225 = sadd.s32 %s224, %s222
      %s226 = smul.addr %s225, 8
      %s227 = scalar_lea.vmem %s1, %s226
      %p228 = pneg %p88
      %p229 = pneg %p85
      %s230 = sadd.s32 %s20, %s21
      %p231 = scmp.lt.s32.totalorder %s19, 1
      %s232 = scalar_select %p231, %s19, 1
      %p233 = scmp.lt.s32.totalorder %s230, 0
      %s234 = scalar_select %p233, %s230, 0
      %s235 = sadd.s32 %s234, %s232
      %s236 = smul.addr %s235, 8
      %s237 = scalar_lea.vmem %s2, %s236
      %p238 = pneg %p118
      %p239 = pneg %p115
      %p240 = pneg %p146
      %p241 = pneg %p143
      %p242 = scmp.lt.s32.totalorder %s19, 1
      %s243 = scalar_select %p242, %s19, 1
      %p244 = scmp.lt.s32.totalorder %s20, 0
      %s245 = scalar_select %p244, %s20, 0
      %s246 = sadd.s32 %s245, %s243
      %s247 = scalar_lea.vmem %s3, %s246
      %s248 = sadd.s32 %s20, %s21
      %p249 = scmp.lt.s32.totalorder %s19, 1
      %s250 = scalar_select %p249, %s19, 1
      %p251 = scmp.lt.s32.totalorder %s248, 0
      %s252 = scalar_select %p251, %s248, 0
      %s253 = smul.addr %s250, 4
      %s254 = sadd.s32 %s252, %s253
      %s255 = smul.addr %s254, 8
      %s256 = scalar_lea.vmem %s0, %s255
      %s257 = sadd.s32 %s20, %s21
      %s258 = sadd.s32 %s20, %s21
      %p259 = scmp.lt.s32.totalorder %s19, 1
      %s260 = scalar_select %p259, %s19, 1
      %p261 = scmp.lt.s32.totalorder %s258, 0
      %s262 = scalar_select %p261, %s258, 0
      %s263 = sadd.s32 %s262, %s260
      %s264 = smul.addr %s263, 8
      %s265 = scalar_lea.vmem %s1, %s264
      %s266 = sadd.s32 %s20, %s21
      %s267 = sadd.s32 %s20, %s21
      %p268 = scmp.lt.s32.totalorder %s19, 1
      %s269 = scalar_select %p268, %s19, 1
      %p270 = scmp.lt.s32.totalorder %s267, 0
      %s271 = scalar_select %p270, %s267, 0
      %s272 = sadd.s32 %s271, %s269
      %s273 = smul.addr %s272, 8
      %s274 = scalar_lea.vmem %s2, %s273
      %s275 = sadd.s32 %s20, %s21
      %p276 = scmp.lt.s32.totalorder %s19, 1
      %s277 = scalar_select %p276, %s19, 1
      %p278 = scmp.lt.s32.totalorder %s20, 0
      %s279 = scalar_select %p278, %s20, 0
      %s280 = sadd.s32 %s279, %s277
      %s281 = scalar_lea.vmem %s3, %s280
      %v282 = vld [vmem:[%s256] sm:$0xff]
      %s283 = scalar_lea.vmem %s256, 8
      %v284 = vld [vmem:[%s283] sm:$0xff]
      %s285 = scalar_lea.vmem %s256, 16
      %v286 = vld [vmem:[%s285] sm:$0xff]
      %s287 = scalar_lea.vmem %s256, 24
      %v288 = vld [vmem:[%s287] sm:$0xff]
      %v289 = vld [vmem:[%s265] sm:$0xff]
      %v290 = vsub.f32 %v286, 0.5
      %v291 = vadd.f32 %v286, 6.0
      %v292 = vadd.f32 %v286, 6.5
      %v293 = vadd.f32 %v290, 52.458332
      %v294 = vmul.f32 %v293, %v290
      %v295 = vadd.f32 %v294, 1203.8342
      %v296 = vmul.f32 %v295, %v290
      %v297 = vadd.f32 %v296, 15784.881
      %v298 = vmul.f32 %v297, %v290
      %v299 = vadd.f32 %v298, 129347.26
      %v300 = vmul.f32 %v299, %v290
      %v301 = vadd.f32 %v300, 678289.7
      %v302 = vmul.f32 %v301, %v290
      %v303 = vadd.f32 %v302, 2222880.5
      %v304 = vmul.f32 %v303, %v290
      %v305 = vadd.f32 %v304, 4162388.0
      %v306 = vmul.f32 %v305, %v290
      %v307 = vadd.f32 %v306, 3409662.8
      %v308 = vadd.f32 %v290, 28.0
      %v309 = vmul.f32 %v308, %v290
      %v310 = vadd.f32 %v309, 322.0
      %v311 = vmul.f32 %v310, %v290
      %v312 = vadd.f32 %v311, 1960.0
      %v313 = vmul.f32 %v312, %v290
      %v314 = vadd.f32 %v313, 6769.0
      %v315 = vmul.f32 %v314, %v290
      %v316 = vadd.f32 %v315, 13132.0
      %v317 = vmul.f32 %v316, %v290
      %v318 = vadd.f32 %v317, 13068.0
      %v319 = vmul.f32 %v318, %v290
      %v320 = vadd.f32 %v319, 5040.0
      %v321 = vmul.f32 %v320, %v290
      %v322 = vadd.f32 %v321, 0.0
      %v323 = vadd.f32 %v286, 52.458332
      %v324 = vmul.f32 %v323, %v286
      %v325 = vadd.f32 %v324, 1203.8342
      %v326 = vmul.f32 %v325, %v286
      %v327 = vadd.f32 %v326, 15784.881
      %v328 = vmul.f32 %v327, %v286
      %v329 = vadd.f32 %v328, 129347.26
      %v330 = vmul.f32 %v329, %v286
      %v331 = vadd.f32 %v330, 678289.7
      %v332 = vmul.f32 %v331, %v286
      %v333 = vadd.f32 %v332, 2222880.5
      %v334 = vmul.f32 %v333, %v286
      %v335 = vadd.f32 %v334, 4162388.0
      %v336 = vmul.f32 %v335, %v286
      %v337 = vadd.f32 %v336, 3409662.8
      %v338 = vadd.f32 %v286, 28.0
      %v339 = vmul.f32 %v338, %v286
      %v340 = vadd.f32 %v339, 322.0
      %v341 = vmul.f32 %v340, %v286
      %v342 = vadd.f32 %v341, 1960.0
      %v343 = vmul.f32 %v342, %v286
      %v344 = vadd.f32 %v343, 6769.0
      %v345 = vmul.f32 %v344, %v286
      %v346 = vadd.f32 %v345, 13132.0
      %v347 = vmul.f32 %v346, %v286
      %v348 = vadd.f32 %v347, 13068.0
      %v349 = vmul.f32 %v348, %v286
      %v350 = vadd.f32 %v349, 5040.0
      %v351 = vmul.f32 %v350, %v286
      %v352 = vadd.f32 %v351, 0.0
      %v353 = vmul.f32 %v307, %v352
      %v354 = vmul.f32 %v322, %v337
      %v355 = vrcp.pop %v354
      %v356 = vmul.f32 %v354, %v355
      %v357 = vsub.f32 1.0, %v356
      %v358 = vmul.f32 %v355, %v357
      %v359 = vadd.f32 %v355, %v358
      %vm360 = vweird.f32 %v354
      %vm361 = vweird.f32 %v355
      %vm362 = vmor %vm360, %vm361
      %v363 = vsel %vm362, %v355, %v359
      %v364 = vand.u32 2147483647, %v354
      %vm365 = vcmp.eq.f32.partialorder %v364, 8.507059e+37
      %v366 = vand.u32 %v354, 2147483648
      %v367 = vor.u32 1.1754944e-38, %v366
      %v368 = vsel %vm365, %v367, %v363
      %v369 = vmul.f32 %v353, %v368
      %v370 = vsub.f32 %v286, 1.0
      %v371 = vrcp.pop %v292
      %v372 = vmul.f32 %v292, %v371
      %v373 = vsub.f32 1.0, %v372
      %v374 = vmul.f32 %v371, %v373
      %v375 = vadd.f32 %v371, %v374
      %vm376 = vweird.f32 %v292
      %vm377 = vweird.f32 %v371
      %vm378 = vmor %vm376, %vm377
      %v379 = vsel %vm378, %v371, %v375
      %v380 = vand.u32 2147483647, %v292
      %vm381 = vcmp.eq.f32.partialorder %v380, 8.507059e+37
      %v382 = vand.u32 %v292, 2147483648
      %v383 = vor.u32 1.1754944e-38, %v382
      %v384 = vsel %vm381, %v383, %v379
      %v385 = vmul.f32 %v291, %v384
      %v386 = vlog2.pop %v385
      %v387 = vmul.f32 %v386, 0.6931472
      %v388 = vmul.f32 %v370, %v387
      %v389 = vmul.f32 %v388, 1.442695
      %v390 = vpow.pop %v389
      %v391 = vmul.f32 %v292, %v288
      %v392 = vmul.f32 %v284, %v284
      %v393 = vmul.f32 %v391, %v392
      %v394 = vrsqrt.pop %v393
      %v395 = vmul.f32 %v394, %v393
      %v396 = vmul.f32 %v395, %v394
      %v397 = vmul.f32 0.5, %v396
      %v398 = vsub.f32 1.5, %v397
      %v399 = vmul.f32 %v394, %v398
      %vm400 = vweird.f32 %v393
      %vm401 = vweird.f32 %v394
      %vm402 = vmor %vm400, %vm401
      %v403 = vsel %vm402, %v394, %v399
      %v404 = vmul.f32 %v390, 0.4121803
      %v405 = vmul.f32 %v404, %v369
      %v406 = vmul.f32 %v405, %v403
      %v407 = vsub.f32 %v289, %v282
      %v408 = vmul.f32 %v407, %v407
      %v409 = vmul.f32 %v288, 2.0
      %v410 = vadd.f32 %v284, 1.0
      %v411 = vmul.f32 %v409, %v410
      %v412 = vmul.f32 %v286, 2.0
      %v413 = vsub.f32 %v412, 1.0
      %v414 = vmul.f32 %v413, %v284
      %v415 = vmul.f32 %v414, %v408
      %v416 = vadd.f32 %v411, %v415
      %v417 = vmul.f32 %v406, %v416
      %v418 = vadd.f32 %v412, %v284
      %v419 = vmul.f32 %v408, %v418
      %v420 = vadd.f32 %v417, %v419
      %v421 = vld [vmem:[%s274] sm:$0xff]
      %v422 = vmul.f32 %v420, %v421
      %p423 = scmp.eq.s32.totalorder %s21, 0
      // Predicated region
      $region33: #{evidential_loss.1} parent=31 // pred_check
        %p424 = pneg %p423
      $region34: #{evidential_loss.1} parent=31 // pred_check_branch
        %426 = sbr.rel (%p424) target = $region36
      $region35: #{evidential_loss.1} parent=31 // pred_region
        %427 = vst [vmem:[#allocation2] sm:$0x1] 0.0
      $region36: #{evidential_loss.1} parent=31 // pred_fallthru
        _
      %v428 = vld [vmem:[#allocation2] sm:$0x1]
      %v429 = vrot.slane %v422, 4
      %v430 = vadd.f32 %v422, %v429
      %v431 = vrot.slane %v430, 2
      %v432 = vadd.f32 %v430, %v431
      %v433 = vrot.slane %v432, 1
      %v434 = vadd.f32 %v432, %v433
      %v435 = vadd.f32 %v428, %v434
      %436 = vst [vmem:[#allocation2] sm:$0x1] %v435
      // Predicated region
      $region37: #{evidential_loss.1} parent=31 // pred_check
        %p437 = pneg %p423
      $region38: #{evidential_loss.1} parent=31 // pred_check_branch
        %439 = sbr.rel (%p437) target = $region40
      $region39: #{evidential_loss.1} parent=31 // pred_region
        %v440 = vld [vmem:[#allocation2] sm:$0x1]
        %441 = vst [vmem:[%s281] sm:$0x1] %v440
      $region40: #{evidential_loss.1} parent=31 // pred_fallthru
        _
      %p442 = scmp.lt.s32.totalorder %s19, 1
      %s443 = scalar_select %p442, %s19, 1
      %p444 = scmp.lt.s32.totalorder %s20, 0
      %s445 = scalar_select %p444, %s20, 0
      %s446 = sadd.s32 %s445, %s443
      %s447 = scalar_lea.vmem %s3, %s446
      // Predicated region
      $region41: #{evidential_loss.1} parent=31 // pred_check
        %p448 = pneg %p143
      $region42: #{evidential_loss.1} parent=31 // pred_check_branch
        %450 = sbr.rel (%p448) target = $region44
      $region43: #{evidential_loss.1} parent=31 // pred_region
        _
      $region44: #{evidential_loss.1} parent=31 // pred_fallthru
        _
    $region32: #{evidential_loss.1} parent=5 // pred_fallthru
      _
    %p451 = scmp.le.s32.totalorder 2, %s9
    // Predicated region
    $region45: #{evidential_loss.1} parent=5 // pred_check
      %p452 = pneg %p451
    $region46: #{evidential_loss.1} parent=5 // pred_check_branch
      %454 = sbr.rel (%p452) target = $region48
    $region47: #{evidential_loss.1} parent=5 // pred_region
      %s455 = ssub.s32 %s9, 2
      // Predicated region
      $region49: #{evidential_loss.1} parent=47 // pred_check
        %p456 = pneg %p149
      $region50: #{evidential_loss.1} parent=47 // pred_check_branch
        %458 = sbr.rel (%p456) target = $region52
      $region51: #{evidential_loss.1} parent=47 // pred_region
        %p459 = scmp.lt.s32.totalorder %s22, 1
        %s460 = scalar_select %p459, %s22, 1
        %p461 = scmp.lt.s32.totalorder %s23, 0
        %s462 = scalar_select %p461, %s23, 0
        %s463 = sadd.s32 %s462, %s460
        %s464 = scalar_lea.vmem %s3, %s463
      $region52: #{evidential_loss.1} parent=47 // pred_fallthru
        _
    $region48: #{evidential_loss.1} parent=5 // pred_fallthru
      _
  $region6: #{evidential_loss.1} parent=0 // loop_footer
    %s13 = sadd.s32 1, %s9
  $region7: #{evidential_loss.1} parent=0 // loop_footer_branch
    %8 = sbr.rel target = $region3
  $region8: #{evidential_loss.1} parent=0 // loop_exit
    _

</llo_original>
